<compile_context>
chip_gen: v6e
topology: v6e:2x2x1
jax: 0.10.0
libtpu: 0.0.40
codegen_flags: <defaults>
</compile_context>

<pallas_src>
import functools

import jax
import jax.numpy as jnp
from jax.experimental import pallas as pl
from jax.experimental.pallas import tpu as pltpu


def _qconv_vqc_fused_kernel(cw_ref, sw_ref, xp_ref, o_ref):
    """Fused im2col + closed-form VQC.

    cw_ref, sw_ref : SMEM (8,) f32 -- cos / sin of the entangler angles for
                                      qubits 1..8 (qubit 0 cancels analytically)
    xp_ref         : VMEM (tile_b, Hp, Wp) f32 -- zero-padded last-channel plane
    o_ref          : VMEM (tile_b, Ho, Wo)  f32
    """
    Ho = o_ref.shape[1]
    Wo = o_ref.shape[2]

    x = xp_ref[...]
    # Two EUP transcendentals per padded pixel (instead of 8 cos per output).
    cx = jnp.cos(x)
    sx = jnp.sin(x)

    acc = None
    for q in range(1, 9):                     # static unroll over patch offsets
        dy, dx = q // 3, q % 3
        c = cx[:, dy:dy + Ho, dx:dx + Wo]     # static shifted views (in VMEM)
        s = sx[:, dy:dy + Ho, dx:dx + Wo]
        # cos(x + w_q) = cos(x)cos(w_q) - sin(x)sin(w_q)
        term = c * cw_ref[q - 1] - s * sw_ref[q - 1]
        acc = term if acc is None else acc * term
    o_ref[...] = acc


def _pick_tile_b(B, Hp, Wp, max_block_bytes=1 << 20):
    """Largest divisor of B whose input block stays under max_block_bytes and
    (when B >= 2) keeps at least 2 grid steps for v7x megacore sharding."""
    per_plane_bytes = Hp * Wp * 4
    cap = max(1, max_block_bytes // per_plane_bytes)
    tile_b = 1
    for d in range(1, B + 1):
        if B % d != 0 or d > cap:
            continue
        if B >= 2 and (B // d) < 2:
            continue
        tile_b = d
    return tile_b


def qconv2d_3x3_forward(x, vqc_weights, output_filters,
                        strides=1, padding="same"):
    """x: (B, C, H, W) float32 NCHW.  vqc_weights: (n_qlayers, 9) angles."""
    # TODO(synk): closed-form VQC is exact only for n_qlayers == 1 (angle
    #             embedding + basic entangler); deeper circuits would need a
    #             statevector simulator which has no clean Pallas equivalent.
    assert strides == 1, "original module's loop semantics only exercised at stride=1"
    assert vqc_weights.shape[0] == 1, "closed form only valid for n_qlayers == 1"
    assert vqc_weights.shape[1] == 9, "expected a 9-qubit (3x3) VQC"

    B, C, H, W = x.shape
    k = 3
    if padding == "same":
        h_pad = int(((H - 1) * strides - H + (k - 1) + 1) / 2)
        w_pad = int(((W - 1) * strides - W + (k - 1) + 1) / 2)
    else:
        h_pad = w_pad = 0
    H_out = int((H - (k - 1) + 2 * h_pad - 1) / strides + 1)
    W_out = int((W - (k - 1) + 2 * w_pad - 1) / strides + 1)
    Hp, Wp = H + 2 * h_pad, W + 2 * w_pad

    # Only the last input channel survives (the k-loop in the reference
    # overwrites x_new for every input channel).
    xc = x[:, -1, :, :].astype(jnp.float32)
    xp = jnp.pad(xc, ((0, 0), (h_pad, h_pad), (w_pad, w_pad)))   # ZeroPad2d

    # Entangler angles for qubits 1..8 (qubit 0 cancels); precompute cos/sin
    # once on the host side so the kernel only does 2 transcendentals/pixel.
    w8 = vqc_weights[0, 1:9].astype(jnp.float32)                 # (8,)
    cw = jnp.cos(w8)
    sw = jnp.sin(w8)

    tile_b = _pick_tile_b(B, Hp, Wp)
    grid = (B // tile_b,)

    y = pl.pallas_call(
        _qconv_vqc_fused_kernel,
        out_shape=jax.ShapeDtypeStruct((B, H_out, W_out), jnp.float32),
        grid_spec=pltpu.PrefetchScalarGridSpec(
            num_scalar_prefetch=0,
            grid=grid,
            in_specs=[
                pl.BlockSpec(memory_space=pltpu.MemorySpace.SMEM),        # cos(w)
                pl.BlockSpec(memory_space=pltpu.MemorySpace.SMEM),        # sin(w)
                pl.BlockSpec((tile_b, Hp, Wp), lambda b: (b, 0, 0)),      # padded plane
            ],
            out_specs=pl.BlockSpec((tile_b, H_out, W_out), lambda b: (b, 0, 0)),
        ),
        compiler_params=pltpu.CompilerParams(
            dimension_semantics=("parallel",)),
    )(cw, sw, xp)

    # Every output filter j receives an identical copy (loop-overwrite
    # semantics of the reference module).
    y = jnp.broadcast_to(y[:, None, :, :], (B, output_filters, H_out, W_out))
    return y.astype(jnp.float32)


def _reference_forward(x, vqc_weights, output_filters, padding="same"):
    """Pure-JAX reference of the same closed-form semantics (for checking)."""
    B, C, H, W = x.shape
    pad = 1 if padding == "same" else 0
    H_out, W_out = H - 2 + 2 * pad, W - 2 + 2 * pad
    xc = x[:, -1, :, :].astype(jnp.float32)
    xp = jnp.pad(xc, ((0, 0), (pad, pad), (pad, pad)))
    acc = jnp.ones((B, H_out, W_out), jnp.float32)
    for q in range(1, 9):
        dy, dx = q // 3, q % 3
        acc = acc * jnp.cos(xp[:, dy:dy + H_out, dx:dx + W_out] + vqc_weights[0, q])
    return jnp.broadcast_to(acc[:, None], (B, output_filters, H_out, W_out))


if __name__ == "__main__":
    key = jax.random.PRNGKey(0)
    kx, kw = jax.random.split(key)

    B, C, H, W = 2, 4, 16, 16
    output_filters = 4
    n_qlayers, n_qubits = 1, 9

    x = jax.random.normal(kx, (B, C, H, W), dtype=jnp.float32)
    # PennyLane TorchLayer-style init: uniform angles in [0, 2*pi)
    vqc_weights = jax.random.uniform(
        kw, (n_qlayers, n_qubits), minval=0.0, maxval=2.0 * jnp.pi,
        dtype=jnp.float32)

    fwd = jax.jit(functools.partial(qconv2d_3x3_forward,
                                    output_filters=output_filters))
    out = fwd(x, vqc_weights)
    out = jax.block_until_ready(out)

    ref = _reference_forward(x, vqc_weights, output_filters)
    assert out.shape == (B, output_filters, H, W), out.shape
    assert jnp.allclose(out, ref, atol=1e-5, rtol=1e-5)

    print("KERNEL_OK")
</pallas_src>

<mosaic_0001>
module attributes {stable_mosaic.version = 11 : i64} {
  func.func @_qconv_vqc_fused_kernel(%arg0: i32, %arg1: memref<8xf32, #tpu.memory_space<smem>>, %arg2: memref<8xf32, #tpu.memory_space<smem>>, %arg3: memref<1x18x18xf32, #tpu.memory_space<vmem>>, %arg4: memref<1x16x16xf32, #tpu.memory_space<vmem>>) attributes {dimension_semantics = [#tpu.dimension_semantics<parallel>], iteration_bounds = array<i64: 2>, scalar_prefetch = 0 : i64, scratch_operands = 0 : i64, tpu.core_type = #tpu.core_type<tc>, window_params = [{transform_indices = @transform_0, window_bounds = array<i64: 8>}, {transform_indices = @transform_1, window_bounds = array<i64: 8>}, {transform_indices = @transform_2, window_bounds = array<i64: 1, 18, 18>}, {transform_indices = @transform_3, window_bounds = array<i64: 1, 16, 16>}]} {
    %c0 = arith.constant 0 : index
    %c0_0 = arith.constant 0 : index
    %c0_1 = arith.constant 0 : index
    %0 = vector.load %arg3[%c0, %c0_0, %c0_1] : memref<1x18x18xf32, #tpu.memory_space<vmem>>, vector<1x18x18xf32>
    %1 = math.cos %0 : vector<1x18x18xf32>
    %2 = math.sin %0 : vector<1x18x18xf32>
    %3 = vector.extract_strided_slice %1 {offsets = [0, 0, 1], sizes = [1, 16, 16], strides = [1, 1, 1]} : vector<1x18x18xf32> to vector<1x16x16xf32>
    %4 = vector.extract_strided_slice %2 {offsets = [0, 0, 1], sizes = [1, 16, 16], strides = [1, 1, 1]} : vector<1x18x18xf32> to vector<1x16x16xf32>
    %c0_2 = arith.constant 0 : index
    %5 = memref.load %arg1[%c0_2] : memref<8xf32, #tpu.memory_space<smem>>
    %6 = vector.broadcast %5 : f32 to vector<1x16x16xf32>
    %7 = arith.mulf %3, %6 : vector<1x16x16xf32>
    %c0_3 = arith.constant 0 : index
    %8 = memref.load %arg2[%c0_3] : memref<8xf32, #tpu.memory_space<smem>>
    %9 = vector.broadcast %8 : f32 to vector<1x16x16xf32>
    %10 = arith.mulf %4, %9 : vector<1x16x16xf32>
    %11 = arith.subf %7, %10 : vector<1x16x16xf32>
    %12 = vector.extract_strided_slice %1 {offsets = [0, 0, 2], sizes = [1, 16, 16], strides = [1, 1, 1]} : vector<1x18x18xf32> to vector<1x16x16xf32>
    %13 = vector.extract_strided_slice %2 {offsets = [0, 0, 2], sizes = [1, 16, 16], strides = [1, 1, 1]} : vector<1x18x18xf32> to vector<1x16x16xf32>
    %c1 = arith.constant 1 : index
    %14 = memref.load %arg1[%c1] : memref<8xf32, #tpu.memory_space<smem>>
    %15 = vector.broadcast %14 : f32 to vector<1x16x16xf32>
    %16 = arith.mulf %12, %15 : vector<1x16x16xf32>
    %c1_4 = arith.constant 1 : index
    %17 = memref.load %arg2[%c1_4] : memref<8xf32, #tpu.memory_space<smem>>
    %18 = vector.broadcast %17 : f32 to vector<1x16x16xf32>
    %19 = arith.mulf %13, %18 : vector<1x16x16xf32>
    %20 = arith.subf %16, %19 : vector<1x16x16xf32>
    %21 = arith.mulf %11, %20 : vector<1x16x16xf32>
    %22 = vector.extract_strided_slice %1 {offsets = [0, 1, 0], sizes = [1, 16, 16], strides = [1, 1, 1]} : vector<1x18x18xf32> to vector<1x16x16xf32>
    %23 = vector.extract_strided_slice %2 {offsets = [0, 1, 0], sizes = [1, 16, 16], strides = [1, 1, 1]} : vector<1x18x18xf32> to vector<1x16x16xf32>
    %c2 = arith.constant 2 : index
    %24 = memref.load %arg1[%c2] : memref<8xf32, #tpu.memory_space<smem>>
    %25 = vector.broadcast %24 : f32 to vector<1x16x16xf32>
    %26 = arith.mulf %22, %25 : vector<1x16x16xf32>
    %c2_5 = arith.constant 2 : index
    %27 = memref.load %arg2[%c2_5] : memref<8xf32, #tpu.memory_space<smem>>
    %28 = vector.broadcast %27 : f32 to vector<1x16x16xf32>
    %29 = arith.mulf %23, %28 : vector<1x16x16xf32>
    %30 = arith.subf %26, %29 : vector<1x16x16xf32>
    %31 = arith.mulf %21, %30 : vector<1x16x16xf32>
    %32 = vector.extract_strided_slice %1 {offsets = [0, 1, 1], sizes = [1, 16, 16], strides = [1, 1, 1]} : vector<1x18x18xf32> to vector<1x16x16xf32>
    %33 = vector.extract_strided_slice %2 {offsets = [0, 1, 1], sizes = [1, 16, 16], strides = [1, 1, 1]} : vector<1x18x18xf32> to vector<1x16x16xf32>
    %c3 = arith.constant 3 : index
    %34 = memref.load %arg1[%c3] : memref<8xf32, #tpu.memory_space<smem>>
    %35 = vector.broadcast %34 : f32 to vector<1x16x16xf32>
    %36 = arith.mulf %32, %35 : vector<1x16x16xf32>
    %c3_6 = arith.constant 3 : index
    %37 = memref.load %arg2[%c3_6] : memref<8xf32, #tpu.memory_space<smem>>
    %38 = vector.broadcast %37 : f32 to vector<1x16x16xf32>
    %39 = arith.mulf %33, %38 : vector<1x16x16xf32>
    %40 = arith.subf %36, %39 : vector<1x16x16xf32>
    %41 = arith.mulf %31, %40 : vector<1x16x16xf32>
    %42 = vector.extract_strided_slice %1 {offsets = [0, 1, 2], sizes = [1, 16, 16], strides = [1, 1, 1]} : vector<1x18x18xf32> to vector<1x16x16xf32>
    %43 = vector.extract_strided_slice %2 {offsets = [0, 1, 2], sizes = [1, 16, 16], strides = [1, 1, 1]} : vector<1x18x18xf32> to vector<1x16x16xf32>
    %c4 = arith.constant 4 : index
    %44 = memref.load %arg1[%c4] : memref<8xf32, #tpu.memory_space<smem>>
    %45 = vector.broadcast %44 : f32 to vector<1x16x16xf32>
    %46 = arith.mulf %42, %45 : vector<1x16x16xf32>
    %c4_7 = arith.constant 4 : index
    %47 = memref.load %arg2[%c4_7] : memref<8xf32, #tpu.memory_space<smem>>
    %48 = vector.broadcast %47 : f32 to vector<1x16x16xf32>
    %49 = arith.mulf %43, %48 : vector<1x16x16xf32>
    %50 = arith.subf %46, %49 : vector<1x16x16xf32>
    %51 = arith.mulf %41, %50 : vector<1x16x16xf32>
    %52 = vector.extract_strided_slice %1 {offsets = [0, 2, 0], sizes = [1, 16, 16], strides = [1, 1, 1]} : vector<1x18x18xf32> to vector<1x16x16xf32>
    %53 = vector.extract_strided_slice %2 {offsets = [0, 2, 0], sizes = [1, 16, 16], strides = [1, 1, 1]} : vector<1x18x18xf32> to vector<1x16x16xf32>
    %c5 = arith.constant 5 : index
    %54 = memref.load %arg1[%c5] : memref<8xf32, #tpu.memory_space<smem>>
    %55 = vector.broadcast %54 : f32 to vector<1x16x16xf32>
    %56 = arith.mulf %52, %55 : vector<1x16x16xf32>
    %c5_8 = arith.constant 5 : index
    %57 = memref.load %arg2[%c5_8] : memref<8xf32, #tpu.memory_space<smem>>
    %58 = vector.broadcast %57 : f32 to vector<1x16x16xf32>
    %59 = arith.mulf %53, %58 : vector<1x16x16xf32>
    %60 = arith.subf %56, %59 : vector<1x16x16xf32>
    %61 = arith.mulf %51, %60 : vector<1x16x16xf32>
    %62 = vector.extract_strided_slice %1 {offsets = [0, 2, 1], sizes = [1, 16, 16], strides = [1, 1, 1]} : vector<1x18x18xf32> to vector<1x16x16xf32>
    %63 = vector.extract_strided_slice %2 {offsets = [0, 2, 1], sizes = [1, 16, 16], strides = [1, 1, 1]} : vector<1x18x18xf32> to vector<1x16x16xf32>
    %c6 = arith.constant 6 : index
    %64 = memref.load %arg1[%c6] : memref<8xf32, #tpu.memory_space<smem>>
    %65 = vector.broadcast %64 : f32 to vector<1x16x16xf32>
    %66 = arith.mulf %62, %65 : vector<1x16x16xf32>
    %c6_9 = arith.constant 6 : index
    %67 = memref.load %arg2[%c6_9] : memref<8xf32, #tpu.memory_space<smem>>
    %68 = vector.broadcast %67 : f32 to vector<1x16x16xf32>
    %69 = arith.mulf %63, %68 : vector<1x16x16xf32>
    %70 = arith.subf %66, %69 : vector<1x16x16xf32>
    %71 = arith.mulf %61, %70 : vector<1x16x16xf32>
    %72 = vector.extract_strided_slice %1 {offsets = [0, 2, 2], sizes = [1, 16, 16], strides = [1, 1, 1]} : vector<1x18x18xf32> to vector<1x16x16xf32>
    %73 = vector.extract_strided_slice %2 {offsets = [0, 2, 2], sizes = [1, 16, 16], strides = [1, 1, 1]} : vector<1x18x18xf32> to vector<1x16x16xf32>
    %c7 = arith.constant 7 : index
    %74 = memref.load %arg1[%c7] : memref<8xf32, #tpu.memory_space<smem>>
    %75 = vector.broadcast %74 : f32 to vector<1x16x16xf32>
    %76 = arith.mulf %72, %75 : vector<1x16x16xf32>
    %c7_10 = arith.constant 7 : index
    %77 = memref.load %arg2[%c7_10] : memref<8xf32, #tpu.memory_space<smem>>
    %78 = vector.broadcast %77 : f32 to vector<1x16x16xf32>
    %79 = arith.mulf %73, %78 : vector<1x16x16xf32>
    %80 = arith.subf %76, %79 : vector<1x16x16xf32>
    %81 = arith.mulf %71, %80 : vector<1x16x16xf32>
    %c0_11 = arith.constant 0 : index
    %c0_12 = arith.constant 0 : index
    %c0_13 = arith.constant 0 : index
    %82 = vector.load %arg4[%c0_11, %c0_12, %c0_13] : memref<1x16x16xf32, #tpu.memory_space<vmem>>, vector<1x16x16xf32>
    tpu.vector_store %arg4[%c0_11, %c0_12, %c0_13], %81 {strides = array<i32>} : memref<1x16x16xf32, #tpu.memory_space<vmem>>, vector<1x16x16xf32>,
    return
  }
  func.func @transform_0(%arg0: i32) -> i32 {
    %c0_i32 = arith.constant 0 : i32
    %c0_i32_0 = arith.constant 0 : i32
    return %c0_i32 : i32
  }
  func.func @transform_1(%arg0: i32) -> i32 {
    %c0_i32 = arith.constant 0 : i32
    %c0_i32_0 = arith.constant 0 : i32
    return %c0_i32 : i32
  }
  func.func @transform_2(%arg0: i32) -> (i32, i32, i32) {
    %c0_i32 = arith.constant 0 : i32
    %c0_i32_0 = arith.constant 0 : i32
    %c0_i32_1 = arith.constant 0 : i32
    return %arg0, %c0_i32, %c0_i32_0 : i32, i32, i32
  }
  func.func @transform_3(%arg0: i32) -> (i32, i32, i32) {
    %c0_i32 = arith.constant 0 : i32
    %c0_i32_0 = arith.constant 0 : i32
    %c0_i32_1 = arith.constant 0 : i32
    return %arg0, %c0_i32, %c0_i32_0 : i32, i32, i32
  }
}

</mosaic_0001>

<llo_original>
// kernel: qconv2d_3x3_forward.1
$region0: #{qconv2d_3x3_forward.1}
  #allocation0 [shape = 'u32[]', space=smem, size = 0x4, offset = 0x4, fixed_abs, tag = 'smem constant byte address 0x4 - core index']
  #allocation1 [shape = 'u32[144,128]{1,0:T(1,128)}', space=vmem, size = 0x12000, scoped, tag = 'internal scratch']
  %s0 = inlined_call_operand.vmem [shape: f32[8], index: 0, kind: input, shape index: {}]
  %s1 = inlined_call_operand.vmem [shape: f32[8], index: 1, kind: input, shape index: {}]
  %s2 = inlined_call_operand.vmem [shape: f32[2,18,18], index: 2, kind: input, shape index: {}]
  %s3 = inlined_call_operand.vmem [shape: f32[2,16,16], index: 3, kind: output, shape index: {}]
  %s4 = sld [smem:[#allocation0]]
  $region53: #{qconv2d_3x3_forward.1} parent=0
    _
  %s6 = ssub.s32 1, %s4
  %s7 = scalar_select 0, %s6, %s4
  $region1: #{qconv2d_3x3_forward.1} parent=0
    #allocation2 [shape = 'u8[512]{0}', space=smem, size = 0x200, scoped, tag = 'input window, operand 0, single buffered']
    #allocation3 [shape = 's32[2]{0}', space=sflag, size = 0x8, scoped, tag = 'scoped memory for qconv2d_3x3_forward.1']
    #allocation4 [shape = 'u8[512]{0}', space=smem, size = 0x200, scoped, tag = 'input window, operand 1, single buffered']
    #allocation5 [shape = 's32[1]{0}', space=sflag, size = 0x4, scoped, tag = 'scoped memory for qconv2d_3x3_forward.1']
    %8 = vsyncpa [#allocation3], 0
    %9 = vsyncpa [#allocation5], 0
    loop: start=0, step=1, limit=4
    $region2: #{qconv2d_3x3_forward.1} parent=1 // loop_pre_header
      _
    $region3: #{qconv2d_3x3_forward.1} parent=1 // loop_header
      %s11 = sphi 0, %s15
      %p12 = scmp.ge.s32.totalorder %s11, 4
      %s19 = sphi 0, %s19
      %s21 = sphi 0, %s19
      %s22 = sphi 0, %s21
      %s36 = sphi 0, %s22
      %s40 = sphi 0, %s40
      %s42 = sphi 0, %s40
      %s43 = sphi 0, %s42
      %s57 = sphi 0, %s43
      %s63 = sphi 0, %s65
      %s66 = sphi 0, %s63
      %s67 = sphi 0, %s66
      %s83 = sphi 0, %s67
      %s89 = sphi 0, %s91
      %s92 = sphi 0, %s89
      %s93 = sphi 0, %s92
      %s109 = sphi 0, %s93
    $region4: #{qconv2d_3x3_forward.1} parent=1 // loop_header_branch
      %14 = sbr.rel (%p12) target = $region8
    $region5: #{qconv2d_3x3_forward.1} parent=1 // loop_body
      %s16 = ssub.s32 %s11, 1
      %s17 = ssub.s32 %s11, 2
      %s18 = sadd.s32 %s11, 1
      %s20 = sadd.s32 %s19, 1
      %p23 = scmp.eq.s32.totalorder %s11, 1
      %p24 = scmp.ne.s32.totalorder %s19, %s21
      %p25 = scmp.eq.s32.totalorder %s11, 0
      %p26 = por %p24, %p25
      %p27 = scmp.ne.s32.totalorder %s19, %s21
      %p28 = scmp.eq.s32.totalorder %s16, 1
      %p29 = por %p27, %p28
      %p30 = scmp.ne.s32.totalorder %s21, %s22
      %p31 = scmp.eq.s32.totalorder %s16, 0
      %p32 = por %p30, %p31
      %p33 = scmp.ne.s32.totalorder %s21, %s22
      %p34 = scmp.eq.s32.totalorder %s17, 1
      %p35 = por %p33, %p34
      %p37 = scmp.ne.s32.totalorder %s22, %s36
      %p38 = scmp.eq.s32.totalorder %s17, 0
      %p39 = por %p37, %p38
      %s41 = sadd.s32 %s40, 1
      %p44 = scmp.eq.s32.totalorder %s11, 1
      %p45 = scmp.ne.s32.totalorder %s40, %s42
      %p46 = scmp.eq.s32.totalorder %s11, 0
      %p47 = por %p45, %p46
      %p48 = scmp.ne.s32.totalorder %s40, %s42
      %p49 = scmp.eq.s32.totalorder %s16, 1
      %p50 = por %p48, %p49
      %p51 = scmp.ne.s32.totalorder %s42, %s43
      %p52 = scmp.eq.s32.totalorder %s16, 0
      %p53 = por %p51, %p52
      %p54 = scmp.ne.s32.totalorder %s42, %s43
      %p55 = scmp.eq.s32.totalorder %s17, 1
      %p56 = por %p54, %p55
      %p58 = scmp.ne.s32.totalorder %s43, %s57
      %p59 = scmp.eq.s32.totalorder %s17, 0
      %p60 = por %p58, %p59
      %s61 = ssub.s32 %s11, %s18
      %p62 = scmp.eq.s32.totalorder %s61, 0
      %s64 = sadd.s32 %s63, 1
      %s65 = scalar_select %p62, %s63, %s64
      %p68 = pneg %p62
      %p69 = scmp.eq.s32.totalorder %s11, 1
      %p70 = por %p68, %p69
      %p71 = scmp.ne.s32.totalorder %s63, %s66
      %p72 = scmp.eq.s32.totalorder %s11, 0
      %p73 = por %p71, %p72
      %p74 = scmp.ne.s32.totalorder %s63, %s66
      %p75 = scmp.eq.s32.totalorder %s16, 1
      %p76 = por %p74, %p75
      %p77 = scmp.ne.s32.totalorder %s66, %s67
      %p78 = scmp.eq.s32.totalorder %s16, 0
      %p79 = por %p77, %p78
      %p80 = scmp.ne.s32.totalorder %s66, %s67
      %p81 = scmp.eq.s32.totalorder %s17, 1
      %p82 = por %p80, %p81
      %p84 = scmp.ne.s32.totalorder %s67, %s83
      %p85 = scmp.eq.s32.totalorder %s17, 0
      %p86 = por %p84, %p85
      %s87 = ssub.s32 %s11, %s18
      %p88 = scmp.eq.s32.totalorder %s87, 0
      %s90 = sadd.s32 %s89, 1
      %s91 = scalar_select %p88, %s89, %s90
      %p94 = pneg %p88
      %p95 = scmp.eq.s32.totalorder %s11, 1
      %p96 = por %p94, %p95
      %p97 = scmp.ne.s32.totalorder %s89, %s92
      %p98 = scmp.eq.s32.totalorder %s11, 0
      %p99 = por %p97, %p98
      %p100 = scmp.ne.s32.totalorder %s89, %s92
      %p101 = scmp.eq.s32.totalorder %s16, 1
      %p102 = por %p100, %p101
      %p103 = scmp.ne.s32.totalorder %s92, %s93
      %p104 = scmp.eq.s32.totalorder %s16, 0
      %p105 = por %p103, %p104
      %p106 = scmp.ne.s32.totalorder %s92, %s93
      %p107 = scmp.eq.s32.totalorder %s17, 1
      %p108 = por %p106, %p107
      %p110 = scmp.ne.s32.totalorder %s93, %s109
      %p111 = scmp.eq.s32.totalorder %s17, 0
      %p112 = por %p110, %p111
      %p113 = scmp.le.s32.totalorder 1, %s11
      %p114 = scmp.lt.s32.totalorder %s11, 3
      %p115 = pnand %p113, %p114
      %p116 = pneg %p115
      // Predicated region
      $region9: #{qconv2d_3x3_forward.1} parent=5 // pred_check
        _
      $region10: #{qconv2d_3x3_forward.1} parent=5 // pred_check_branch
        %118 = sbr.rel (%p115) target = $region12
      $region11: #{qconv2d_3x3_forward.1} parent=5 // pred_region
        %s119 = ssub.s32 %s11, 1
        // Predicated region
        $region13: #{qconv2d_3x3_forward.1} parent=11 // pred_check
          %p120 = pneg %p32
        $region14: #{qconv2d_3x3_forward.1} parent=11 // pred_check_branch
          %122 = sbr.rel (%p120) target = $region16
        $region15: #{qconv2d_3x3_forward.1} parent=11 // pred_region
          %s124 = ssub.s32 16, 16
          %125 = vsyncadd [#allocation3], %s124
          %s127 = sshll.u32 %s0, 4
          %s128 = int_to_ptr.vmem [resolvable:$true] %s127
          %130 = dma.vmem_to_smem %s128, 16, [#allocation2], [#allocation3]
        $region16: #{qconv2d_3x3_forward.1} parent=11 // pred_fallthru
          _
        // Predicated region
        $region17: #{qconv2d_3x3_forward.1} parent=11 // pred_check
          %p131 = pneg %p53
        $region18: #{qconv2d_3x3_forward.1} parent=11 // pred_check_branch
          %133 = sbr.rel (%p131) target = $region20
        $region19: #{qconv2d_3x3_forward.1} parent=11 // pred_region
          %s135 = ssub.s32 16, 16
          %136 = vsyncadd [#allocation5], %s135
          %s138 = sshll.u32 %s1, 4
          %s139 = int_to_ptr.vmem [resolvable:$true] %s138
          %141 = dma.vmem_to_smem %s139, 16, [#allocation4], [#allocation5]
        $region20: #{qconv2d_3x3_forward.1} parent=11 // pred_fallthru
          _
      $region12: #{qconv2d_3x3_forward.1} parent=5 // pred_fallthru
        _
      %p142 = scmp.lt.s32.totalorder %s11, 2
      // Predicated region
      $region21: #{qconv2d_3x3_forward.1} parent=5 // pred_check
        %p143 = pneg %p142
      $region22: #{qconv2d_3x3_forward.1} parent=5 // pred_check_branch
        %145 = sbr.rel (%p143) target = $region24
      $region23: #{qconv2d_3x3_forward.1} parent=5 // pred_region
        // Predicated region
        $region25: #{qconv2d_3x3_forward.1} parent=23 // pred_check
          %p146 = pneg %p73
        $region26: #{qconv2d_3x3_forward.1} parent=23 // pred_check_branch
          %148 = sbr.rel (%p146) target = $region28
        $region27: #{qconv2d_3x3_forward.1} parent=23 // pred_region
          %p149 = scmp.lt.s32.totalorder %s11, 1
          %s150 = scalar_select %p149, %s11, 1
          %s151 = smul.addr %s150, 3
          %s152 = smul.addr %s151, 8
          %s153 = scalar_lea.vmem %s2, %s152
        $region28: #{qconv2d_3x3_forward.1} parent=23 // pred_fallthru
          _
      $region24: #{qconv2d_3x3_forward.1} parent=5 // pred_fallthru
        _
      %p154 = scmp.le.s32.totalorder 1, %s11
      %p155 = scmp.lt.s32.totalorder %s11, 3
      %p156 = pnand %p154, %p155
      %p157 = pneg %p156
      // Predicated region
      $region29: #{qconv2d_3x3_forward.1} parent=5 // pred_check
        _
      $region30: #{qconv2d_3x3_forward.1} parent=5 // pred_check_branch
        %159 = sbr.rel (%p156) target = $region32
      $region31: #{qconv2d_3x3_forward.1} parent=5 // pred_region
        %s160 = ssub.s32 %s11, 1
        // Predicated region
        $region33: #{qconv2d_3x3_forward.1} parent=31 // pred_check
          %p161 = pneg %p32
        $region34: #{qconv2d_3x3_forward.1} parent=31 // pred_check_branch
          %163 = sbr.rel (%p161) target = $region36
        $region35: #{qconv2d_3x3_forward.1} parent=31 // pred_region
          %164 = dma.done [#allocation3], 16
        $region36: #{qconv2d_3x3_forward.1} parent=31 // pred_fallthru
          _
        // Predicated region
        $region37: #{qconv2d_3x3_forward.1} parent=31 // pred_check
          %p165 = pneg %p53
        $region38: #{qconv2d_3x3_forward.1} parent=31 // pred_check_branch
          %167 = sbr.rel (%p165) target = $region40
        $region39: #{qconv2d_3x3_forward.1} parent=31 // pred_region
          %168 = dma.done [#allocation5], 16
        $region40: #{qconv2d_3x3_forward.1} parent=31 // pred_fallthru
          _
        %169 = sfence
        %p170 = pneg %p32
        %p171 = pneg %p29
        %p172 = pneg %p53
        %p173 = pneg %p50
        %p174 = scmp.lt.s32.totalorder %s16, 1
        %s175 = scalar_select %p174, %s16, 1
        %s176 = smul.addr %s175, 3
        %s177 = smul.addr %s176, 8
        %s178 = scalar_lea.vmem %s2, %s177
        %p179 = pneg %p79
        %p180 = pneg %p76
        %p181 = pneg %p105
        %p182 = pneg %p102
        %p183 = scmp.lt.s32.totalorder %s16, 1
        %s184 = scalar_select %p183, %s16, 1
        %s185 = smul.addr %s184, 2
        %s186 = smul.addr %s185, 8
        %s187 = scalar_lea.vmem %s3, %s186
        %p188 = scmp.lt.s32.totalorder %s16, 1
        %s189 = scalar_select %p188, %s16, 1
        %s190 = smul.addr %s189, 3
        %s191 = smul.addr %s190, 8
        %s192 = scalar_lea.vmem %s2, %s191
        %p193 = scmp.lt.s32.totalorder %s16, 1
        %s194 = scalar_select %p193, %s16, 1
        %s195 = smul.addr %s194, 2
        %s196 = smul.addr %s195, 8
        %s197 = scalar_lea.vmem %s3, %s196
        %v198 = vld [vmem:[%s192] sm:$0xff]
        %v199 = vld [vmem:[%s192 + $0x8] sm:$0xff]
        %v200 = vld [vmem:[%s192 + $0x10] sm:$0x3]
        %v201 = vand.u32 2147483647, %v198
        %vm202 = vcmp.le.f32.partialorder %v201, 0.7853982
        %vm203 = vcmp.lt.s32.totalorder %v198, 0
        %v204 = vand.u32 %v198, 2139095040
        %v205 = vshrl.u32 %v204, 23
        %v206 = vsub.s32 %v205, 127
        %v207 = vand.u32 2147483647, %v198
        %v208 = vand.u32 %v207, 8388607
        %v209 = vor.u32 %v208, 8388608
        %v210 = vsub.s32 0, %v209
        %v211 = vadd.s32 %v206, 1
        %vm212 = vcmp.gt.s32.totalorder %v211, 0
        %v213 = vsel %vm212, %v211, 0
        %v214 = vshrl.u32 %v213, 5
        %v215 = vand.u32 %v213, 31
        %v216 = vsub.s32 32, %v215
        %v217 = vshrl.u32 683565275, %v216
        %v218 = vshll.u32 683565275, %v215
        %v219 = vshrl.u32 2475754826, %v216
        %v220 = vor.u32 %v218, %v219
        %v221 = vshll.u32 2475754826, %v215
        %v222 = vshrl.u32 2131351028, %v216
        %v223 = vor.u32 %v221, %v222
        %v224 = vshll.u32 2131351028, %v215
        %v225 = vshrl.u32 2102212464, %v216
        %v226 = vor.u32 %v224, %v225
        %v227 = vshll.u32 2102212464, %v215
        %v228 = vshrl.u32 920167782, %v216
        %v229 = vor.u32 %v227, %v228
        %v230 = vshll.u32 920167782, %v215
        %v231 = vshrl.u32 1326507024, %v216
        %v232 = vor.u32 %v230, %v231
        %vm233 = vcmp.lt.s32.totalorder %v214, 1
        %vm234 = vcmp.lt.s32.totalorder %v214, 2
        %vm235 = vcmp.lt.s32.totalorder %v214, 3
        %vm236 = vcmp.lt.s32.totalorder %v214, 4
        %v237 = vsel %vm233, %v217, %v220
        %v238 = vsel %vm236, %v226, 2102212464
        %v239 = vsel %vm235, %v223, %v238
        %v240 = vsel %vm234, %v237, %v239
        %v241 = vsel %vm233, %v220, %v223
        %v242 = vsel %vm236, %v229, 920167782
        %v243 = vsel %vm235, %v226, %v242
        %v244 = vsel %vm234, %v241, %v243
        %v245 = vsel %vm233, %v223, %v226
        %v246 = vsel %vm236, %v232, 1326507024
        %v247 = vsel %vm235, %v229, %v246
        %v248 = vsel %vm234, %v245, %v247
        %v249 = vshll.u32 %v209, 8
        %v250 = vmul.u32.u64.compose %v249, %v248
        %v251 = vextract.low.u32 %v250
        %v252 = vextract.high.u32 %v250
        %v253 = vmul.u32.u64.compose %v249, %v244
        %v254 = vextract.low.u32 %v253
        %v255 = vextract.high.u32 %v253
        %v256 = vmul.u32 %v249, %v240
        %v257 = vadd.s32 %v252, %v254
        %vm258 = vc.u32 %v252, %v254
        %v259 = vadd.s32 %v255, 1
        %v260 = vsel %vm258, %v259, %v255
        %v261 = vadd.s32 %v256, %v260
        %v262 = vadd.s32 %v261, 536870912
        %v263 = vshrl.u32 %v262, 30
        %v264 = vshll.u32 %v263, 30
        %v265 = vsub.s32 %v261, %v264
        %vm266 = vcmp.lt.s32.totalorder %v265, 0
        %v267 = vsub.s32 0, %v265
        %v268 = vsel %vm266, %v267, %v265
        %v269 = vclz %v268
        %v270 = vsub.s32 %v269, 2
        %vm271 = vcmp.gt.s32.totalorder 0, %v270
        %v272 = vsel %vm271, 0, %v270
        %v273 = vsub.s32 32, %v272
        %v274 = vshll.u32 %v265, %v272
        %v275 = vshrl.u32 %v257, %v273
        %v276 = vor.u32 %v274, %v275
        %v277 = vsub.s32 4294967266, %v272
        %v278 = vadd.s32 %v277, 127
        %v279 = vshll.u32 %v278, 23
        %v280 = vor.u32 4788187, %v279
        %v281 = vand.u32 2147483647, %v280
        %v283 = vcvt.s32.f32 %v276
        %v284 = vmul.f32 %v283, %v281
        %v285 = vxor.u32 %v284, 2147483648
        %v286 = vsel %vm203, %v285, %v284
        %v287 = vsub.s32 4, %v263
        %v288 = vsel %vm203, %v287, %v263
        %v289 = vsel %vm202, %v198, %v286
        %v290 = vsel %vm202, 0, %v288
        %v291 = vcosq.f32.pop %v289
        %v292 = vsinq.f32.pop %v289
        %vm293 = vweird.f32 %v198
        %v294 = vand.u32 %v290, 3
        %vm295 = vcmp.lt.s32.totalorder %v294, 2
        %vm296 = vcmp.eq.s32.totalorder %v294, 0
        %v297 = vxor.u32 %v292, 2147483648
        %v298 = vsel %vm296, %v291, %v297
        %vm299 = vcmp.eq.s32.totalorder %v294, 2
        %v300 = vxor.u32 %v291, 2147483648
        %v301 = vsel %vm299, %v300, %v292
        %v302 = vsel %vm295, %v298, %v301
        %v303 = vsel %vm293, nan, %v302
        %v304 = vand.u32 2147483647, %v199
        %vm305 = vcmp.le.f32.partialorder %v304, 0.7853982
        %vm306 = vcmp.lt.s32.totalorder %v199, 0
        %v307 = vand.u32 %v199, 2139095040
        %v308 = vshrl.u32 %v307, 23
        %v309 = vsub.s32 %v308, 127
        %v310 = vand.u32 2147483647, %v199
        %v311 = vand.u32 %v310, 8388607
        %v312 = vor.u32 %v311, 8388608
        %v313 = vsub.s32 0, %v312
        %v314 = vadd.s32 %v309, 1
        %vm315 = vcmp.gt.s32.totalorder %v314, 0
        %v316 = vsel %vm315, %v314, 0
        %v317 = vshrl.u32 %v316, 5
        %v318 = vand.u32 %v316, 31
        %v319 = vsub.s32 32, %v318
        %v320 = vshrl.u32 683565275, %v319
        %v321 = vshll.u32 683565275, %v318
        %v322 = vshrl.u32 2475754826, %v319
        %v323 = vor.u32 %v321, %v322
        %v324 = vshll.u32 2475754826, %v318
        %v325 = vshrl.u32 2131351028, %v319
        %v326 = vor.u32 %v324, %v325
        %v327 = vshll.u32 2131351028, %v318
        %v328 = vshrl.u32 2102212464, %v319
        %v329 = vor.u32 %v327, %v328
        %v330 = vshll.u32 2102212464, %v318
        %v331 = vshrl.u32 920167782, %v319
        %v332 = vor.u32 %v330, %v331
        %v333 = vshll.u32 920167782, %v318
        %v334 = vshrl.u32 1326507024, %v319
        %v335 = vor.u32 %v333, %v334
        %vm336 = vcmp.lt.s32.totalorder %v317, 1
        %vm337 = vcmp.lt.s32.totalorder %v317, 2
        %vm338 = vcmp.lt.s32.totalorder %v317, 3
        %vm339 = vcmp.lt.s32.totalorder %v317, 4
        %v340 = vsel %vm336, %v320, %v323
        %v341 = vsel %vm339, %v329, 2102212464
        %v342 = vsel %vm338, %v326, %v341
        %v343 = vsel %vm337, %v340, %v342
        %v344 = vsel %vm336, %v323, %v326
        %v345 = vsel %vm339, %v332, 920167782
        %v346 = vsel %vm338, %v329, %v345
        %v347 = vsel %vm337, %v344, %v346
        %v348 = vsel %vm336, %v326, %v329
        %v349 = vsel %vm339, %v335, 1326507024
        %v350 = vsel %vm338, %v332, %v349
        %v351 = vsel %vm337, %v348, %v350
        %v352 = vshll.u32 %v312, 8
        %v353 = vmul.u32.u64.compose %v352, %v351
        %v354 = vextract.low.u32 %v353
        %v355 = vextract.high.u32 %v353
        %v356 = vmul.u32.u64.compose %v352, %v347
        %v357 = vextract.low.u32 %v356
        %v358 = vextract.high.u32 %v356
        %v359 = vmul.u32 %v352, %v343
        %v360 = vadd.s32 %v355, %v357
        %vm361 = vc.u32 %v355, %v357
        %v362 = vadd.s32 %v358, 1
        %v363 = vsel %vm361, %v362, %v358
        %v364 = vadd.s32 %v359, %v363
        %v365 = vadd.s32 %v364, 536870912
        %v366 = vshrl.u32 %v365, 30
        %v367 = vshll.u32 %v366, 30
        %v368 = vsub.s32 %v364, %v367
        %vm369 = vcmp.lt.s32.totalorder %v368, 0
        %v370 = vsub.s32 0, %v368
        %v371 = vsel %vm369, %v370, %v368
        %v372 = vclz %v371
        %v373 = vsub.s32 %v372, 2
        %vm374 = vcmp.gt.s32.totalorder 0, %v373
        %v375 = vsel %vm374, 0, %v373
        %v376 = vsub.s32 32, %v375
        %v377 = vshll.u32 %v368, %v375
        %v378 = vshrl.u32 %v360, %v376
        %v379 = vor.u32 %v377, %v378
        %v380 = vsub.s32 4294967266, %v375
        %v381 = vadd.s32 %v380, 127
        %v382 = vshll.u32 %v381, 23
        %v383 = vor.u32 4788187, %v382
        %v384 = vand.u32 2147483647, %v383
        %v386 = vcvt.s32.f32 %v379
        %v387 = vmul.f32 %v386, %v384
        %v388 = vxor.u32 %v387, 2147483648
        %v389 = vsel %vm306, %v388, %v387
        %v390 = vsub.s32 4, %v366
        %v391 = vsel %vm306, %v390, %v366
        %v392 = vsel %vm305, %v199, %v389
        %v393 = vsel %vm305, 0, %v391
        %v394 = vcosq.f32.pop %v392
        %v395 = vsinq.f32.pop %v392
        %vm396 = vweird.f32 %v199
        %v397 = vand.u32 %v393, 3
        %vm398 = vcmp.lt.s32.totalorder %v397, 2
        %vm399 = vcmp.eq.s32.totalorder %v397, 0
        %v400 = vxor.u32 %v395, 2147483648
        %v401 = vsel %vm399, %v394, %v400
        %vm402 = vcmp.eq.s32.totalorder %v397, 2
        %v403 = vxor.u32 %v394, 2147483648
        %v404 = vsel %vm402, %v403, %v395
        %v405 = vsel %vm398, %v401, %v404
        %v406 = vsel %vm396, nan, %v405
        %v407 = vand.u32 2147483647, %v200
        %vm408 = vcmp.le.f32.partialorder %v407, 0.7853982
        %vm409 = vcmp.lt.s32.totalorder %v200, 0
        %v410 = vand.u32 %v200, 2139095040
        %v411 = vshrl.u32 %v410, 23
        %v412 = vsub.s32 %v411, 127
        %v413 = vand.u32 2147483647, %v200
        %v414 = vand.u32 %v413, 8388607
        %v415 = vor.u32 %v414, 8388608
        %v416 = vsub.s32 0, %v415
        %v417 = vadd.s32 %v412, 1
        %vm418 = vcmp.gt.s32.totalorder %v417, 0
        %v419 = vsel %vm418, %v417, 0
        %v420 = vshrl.u32 %v419, 5
        %v421 = vand.u32 %v419, 31
        %v422 = vsub.s32 32, %v421
        %v423 = vshrl.u32 683565275, %v422
        %v424 = vshll.u32 683565275, %v421
        %v425 = vshrl.u32 2475754826, %v422
        %v426 = vor.u32 %v424, %v425
        %v427 = vshll.u32 2475754826, %v421
        %v428 = vshrl.u32 2131351028, %v422
        %v429 = vor.u32 %v427, %v428
        %v430 = vshll.u32 2131351028, %v421
        %v431 = vshrl.u32 2102212464, %v422
        %v432 = vor.u32 %v430, %v431
        %v433 = vshll.u32 2102212464, %v421
        %v434 = vshrl.u32 920167782, %v422
        %v435 = vor.u32 %v433, %v434
        %v436 = vshll.u32 920167782, %v421
        %v437 = vshrl.u32 1326507024, %v422
        %v438 = vor.u32 %v436, %v437
        %vm439 = vcmp.lt.s32.totalorder %v420, 1
        %vm440 = vcmp.lt.s32.totalorder %v420, 2
        %vm441 = vcmp.lt.s32.totalorder %v420, 3
        %vm442 = vcmp.lt.s32.totalorder %v420, 4
        %v443 = vsel %vm439, %v423, %v426
        %v444 = vsel %vm442, %v432, 2102212464
        %v445 = vsel %vm441, %v429, %v444
        %v446 = vsel %vm440, %v443, %v445
        %v447 = vsel %vm439, %v426, %v429
        %v448 = vsel %vm442, %v435, 920167782
        %v449 = vsel %vm441, %v432, %v448
        %v450 = vsel %vm440, %v447, %v449
        %v451 = vsel %vm439, %v429, %v432
        %v452 = vsel %vm442, %v438, 1326507024
        %v453 = vsel %vm441, %v435, %v452
        %v454 = vsel %vm440, %v451, %v453
        %v455 = vshll.u32 %v415, 8
        %v456 = vmul.u32.u64.compose %v455, %v454
        %v457 = vextract.low.u32 %v456
        %v458 = vextract.high.u32 %v456
        %v459 = vmul.u32.u64.compose %v455, %v450
        %v460 = vextract.low.u32 %v459
        %v461 = vextract.high.u32 %v459
        %v462 = vmul.u32 %v455, %v446
        %v463 = vadd.s32 %v458, %v460
        %vm464 = vc.u32 %v458, %v460
        %v465 = vadd.s32 %v461, 1
        %v466 = vsel %vm464, %v465, %v461
        %v467 = vadd.s32 %v462, %v466
        %v468 = vadd.s32 %v467, 536870912
        %v469 = vshrl.u32 %v468, 30
        %v470 = vshll.u32 %v469, 30
        %v471 = vsub.s32 %v467, %v470
        %vm472 = vcmp.lt.s32.totalorder %v471, 0
        %v473 = vsub.s32 0, %v471
        %v474 = vsel %vm472, %v473, %v471
        %v475 = vclz %v474
        %v476 = vsub.s32 %v475, 2
        %vm477 = vcmp.gt.s32.totalorder 0, %v476
        %v478 = vsel %vm477, 0, %v476
        %v479 = vsub.s32 32, %v478
        %v480 = vshll.u32 %v471, %v478
        %v481 = vshrl.u32 %v463, %v479
        %v482 = vor.u32 %v480, %v481
        %v483 = vsub.s32 4294967266, %v478
        %v484 = vadd.s32 %v483, 127
        %v485 = vshll.u32 %v484, 23
        %v486 = vor.u32 4788187, %v485
        %v487 = vand.u32 2147483647, %v486
        %v489 = vcvt.s32.f32 %v482
        %v490 = vmul.f32 %v489, %v487
        %v491 = vxor.u32 %v490, 2147483648
        %v492 = vsel %vm409, %v491, %v490
        %v493 = vsub.s32 4, %v469
        %v494 = vsel %vm409, %v493, %v469
        %v495 = vsel %vm408, %v200, %v492
        %v496 = vsel %vm408, 0, %v494
        %v497 = vcosq.f32.pop %v495
        %v498 = vsinq.f32.pop %v495
        %vm499 = vweird.f32 %v200
        %v500 = vand.u32 %v496, 3
        %vm501 = vcmp.lt.s32.totalorder %v500, 2
        %vm502 = vcmp.eq.s32.totalorder %v500, 0
        %v503 = vxor.u32 %v498, 2147483648
        %v504 = vsel %vm502, %v497, %v503
        %vm505 = vcmp.eq.s32.totalorder %v500, 2
        %v506 = vxor.u32 %v497, 2147483648
        %v507 = vsel %vm505, %v506, %v498
        %v508 = vsel %vm501, %v504, %v507
        %v509 = vsel %vm499, nan, %v508
        %v510 = vand.u32 2147483647, %v198
        %vm511 = vcmp.le.f32.partialorder %v510, 0.7853982
        %vm512 = vcmp.lt.s32.totalorder %v198, 0
        %v513 = vand.u32 %v198, 2139095040
        %v514 = vshrl.u32 %v513, 23
        %v515 = vsub.s32 %v514, 127
        %v516 = vand.u32 2147483647, %v198
        %v517 = vand.u32 %v516, 8388607
        %v518 = vor.u32 %v517, 8388608
        %v519 = vsub.s32 0, %v518
        %v520 = vadd.s32 %v515, 1
        %vm521 = vcmp.gt.s32.totalorder %v520, 0
        %v522 = vsel %vm521, %v520, 0
        %v523 = vshrl.u32 %v522, 5
        %v524 = vand.u32 %v522, 31
        %v525 = vsub.s32 32, %v524
        %v526 = vshrl.u32 683565275, %v525
        %v527 = vshll.u32 683565275, %v524
        %v528 = vshrl.u32 2475754826, %v525
        %v529 = vor.u32 %v527, %v528
        %v530 = vshll.u32 2475754826, %v524
        %v531 = vshrl.u32 2131351028, %v525
        %v532 = vor.u32 %v530, %v531
        %v533 = vshll.u32 2131351028, %v524
        %v534 = vshrl.u32 2102212464, %v525
        %v535 = vor.u32 %v533, %v534
        %v536 = vshll.u32 2102212464, %v524
        %v537 = vshrl.u32 920167782, %v525
        %v538 = vor.u32 %v536, %v537
        %v539 = vshll.u32 920167782, %v524
        %v540 = vshrl.u32 1326507024, %v525
        %v541 = vor.u32 %v539, %v540
        %vm542 = vcmp.lt.s32.totalorder %v523, 1
        %vm543 = vcmp.lt.s32.totalorder %v523, 2
        %vm544 = vcmp.lt.s32.totalorder %v523, 3
        %vm545 = vcmp.lt.s32.totalorder %v523, 4
        %v546 = vsel %vm542, %v526, %v529
        %v547 = vsel %vm545, %v535, 2102212464
        %v548 = vsel %vm544, %v532, %v547
        %v549 = vsel %vm543, %v546, %v548
        %v550 = vsel %vm542, %v529, %v532
        %v551 = vsel %vm545, %v538, 920167782
        %v552 = vsel %vm544, %v535, %v551
        %v553 = vsel %vm543, %v550, %v552
        %v554 = vsel %vm542, %v532, %v535
        %v555 = vsel %vm545, %v541, 1326507024
        %v556 = vsel %vm544, %v538, %v555
        %v557 = vsel %vm543, %v554, %v556
        %v558 = vshll.u32 %v518, 8
        %v559 = vmul.u32.u64.compose %v558, %v557
        %v560 = vextract.low.u32 %v559
        %v561 = vextract.high.u32 %v559
        %v562 = vmul.u32.u64.compose %v558, %v553
        %v563 = vextract.low.u32 %v562
        %v564 = vextract.high.u32 %v562
        %v565 = vmul.u32 %v558, %v549
        %v566 = vadd.s32 %v561, %v563
        %vm567 = vc.u32 %v561, %v563
        %v568 = vadd.s32 %v564, 1
        %v569 = vsel %vm567, %v568, %v564
        %v570 = vadd.s32 %v565, %v569
        %v571 = vadd.s32 %v570, 536870912
        %v572 = vshrl.u32 %v571, 30
        %v573 = vshll.u32 %v572, 30
        %v574 = vsub.s32 %v570, %v573
        %vm575 = vcmp.lt.s32.totalorder %v574, 0
        %v576 = vsub.s32 0, %v574
        %v577 = vsel %vm575, %v576, %v574
        %v578 = vclz %v577
        %v579 = vsub.s32 %v578, 2
        %vm580 = vcmp.gt.s32.totalorder 0, %v579
        %v581 = vsel %vm580, 0, %v579
        %v582 = vsub.s32 32, %v581
        %v583 = vshll.u32 %v574, %v581
        %v584 = vshrl.u32 %v566, %v582
        %v585 = vor.u32 %v583, %v584
        %v586 = vsub.s32 4294967266, %v581
        %v587 = vadd.s32 %v586, 127
        %v588 = vshll.u32 %v587, 23
        %v589 = vor.u32 4788187, %v588
        %v590 = vand.u32 2147483647, %v589
        %v592 = vcvt.s32.f32 %v585
        %v593 = vmul.f32 %v592, %v590
        %v594 = vxor.u32 %v593, 2147483648
        %v595 = vsel %vm512, %v594, %v593
        %v596 = vsub.s32 4, %v572
        %v597 = vsel %vm512, %v596, %v572
        %v598 = vsel %vm511, %v198, %v595
        %v599 = vsel %vm511, 0, %v597
        %v600 = vcosq.f32.pop %v598
        %v601 = vsinq.f32.pop %v598
        %vm602 = vweird.f32 %v198
        %v603 = vadd.s32 %v599, 3
        %v604 = vand.u32 %v603, 3
        %vm605 = vcmp.lt.s32.totalorder %v604, 2
        %vm606 = vcmp.eq.s32.totalorder %v604, 0
        %v607 = vxor.u32 %v601, 2147483648
        %v608 = vsel %vm606, %v600, %v607
        %vm609 = vcmp.eq.s32.totalorder %v604, 2
        %v610 = vxor.u32 %v600, 2147483648
        %v611 = vsel %vm609, %v610, %v601
        %v612 = vsel %vm605, %v608, %v611
        %v613 = vsel %vm602, nan, %v612
        %v614 = vand.u32 2147483647, %v199
        %vm615 = vcmp.le.f32.partialorder %v614, 0.7853982
        %vm616 = vcmp.lt.s32.totalorder %v199, 0
        %v617 = vand.u32 %v199, 2139095040
        %v618 = vshrl.u32 %v617, 23
        %v619 = vsub.s32 %v618, 127
        %v620 = vand.u32 2147483647, %v199
        %v621 = vand.u32 %v620, 8388607
        %v622 = vor.u32 %v621, 8388608
        %v623 = vsub.s32 0, %v622
        %v624 = vadd.s32 %v619, 1
        %vm625 = vcmp.gt.s32.totalorder %v624, 0
        %v626 = vsel %vm625, %v624, 0
        %v627 = vshrl.u32 %v626, 5
        %v628 = vand.u32 %v626, 31
        %v629 = vsub.s32 32, %v628
        %v630 = vshrl.u32 683565275, %v629
        %v631 = vshll.u32 683565275, %v628
        %v632 = vshrl.u32 2475754826, %v629
        %v633 = vor.u32 %v631, %v632
        %v634 = vshll.u32 2475754826, %v628
        %v635 = vshrl.u32 2131351028, %v629
        %v636 = vor.u32 %v634, %v635
        %v637 = vshll.u32 2131351028, %v628
        %v638 = vshrl.u32 2102212464, %v629
        %v639 = vor.u32 %v637, %v638
        %v640 = vshll.u32 2102212464, %v628
        %v641 = vshrl.u32 920167782, %v629
        %v642 = vor.u32 %v640, %v641
        %v643 = vshll.u32 920167782, %v628
        %v644 = vshrl.u32 1326507024, %v629
        %v645 = vor.u32 %v643, %v644
        %vm646 = vcmp.lt.s32.totalorder %v627, 1
        %vm647 = vcmp.lt.s32.totalorder %v627, 2
        %vm648 = vcmp.lt.s32.totalorder %v627, 3
        %vm649 = vcmp.lt.s32.totalorder %v627, 4
        %v650 = vsel %vm646, %v630, %v633
        %v651 = vsel %vm649, %v639, 2102212464
        %v652 = vsel %vm648, %v636, %v651
        %v653 = vsel %vm647, %v650, %v652
        %v654 = vsel %vm646, %v633, %v636
        %v655 = vsel %vm649, %v642, 920167782
        %v656 = vsel %vm648, %v639, %v655
        %v657 = vsel %vm647, %v654, %v656
        %v658 = vsel %vm646, %v636, %v639
        %v659 = vsel %vm649, %v645, 1326507024
        %v660 = vsel %vm648, %v642, %v659
        %v661 = vsel %vm647, %v658, %v660
        %v662 = vshll.u32 %v622, 8
        %v663 = vmul.u32.u64.compose %v662, %v661
        %v664 = vextract.low.u32 %v663
        %v665 = vextract.high.u32 %v663
        %v666 = vmul.u32.u64.compose %v662, %v657
        %v667 = vextract.low.u32 %v666
        %v668 = vextract.high.u32 %v666
        %v669 = vmul.u32 %v662, %v653
        %v670 = vadd.s32 %v665, %v667
        %vm671 = vc.u32 %v665, %v667
        %v672 = vadd.s32 %v668, 1
        %v673 = vsel %vm671, %v672, %v668
        %v674 = vadd.s32 %v669, %v673
        %v675 = vadd.s32 %v674, 536870912
        %v676 = vshrl.u32 %v675, 30
        %v677 = vshll.u32 %v676, 30
        %v678 = vsub.s32 %v674, %v677
        %vm679 = vcmp.lt.s32.totalorder %v678, 0
        %v680 = vsub.s32 0, %v678
        %v681 = vsel %vm679, %v680, %v678
        %v682 = vclz %v681
        %v683 = vsub.s32 %v682, 2
        %vm684 = vcmp.gt.s32.totalorder 0, %v683
        %v685 = vsel %vm684, 0, %v683
        %v686 = vsub.s32 32, %v685
        %v687 = vshll.u32 %v678, %v685
        %v688 = vshrl.u32 %v670, %v686
        %v689 = vor.u32 %v687, %v688
        %v690 = vsub.s32 4294967266, %v685
        %v691 = vadd.s32 %v690, 127
        %v692 = vshll.u32 %v691, 23
        %v693 = vor.u32 4788187, %v692
        %v694 = vand.u32 2147483647, %v693
        %v696 = vcvt.s32.f32 %v689
        %v697 = vmul.f32 %v696, %v694
        %v698 = vxor.u32 %v697, 2147483648
        %v699 = vsel %vm616, %v698, %v697
        %v700 = vsub.s32 4, %v676
        %v701 = vsel %vm616, %v700, %v676
        %v702 = vsel %vm615, %v199, %v699
        %v703 = vsel %vm615, 0, %v701
        %v704 = vcosq.f32.pop %v702
        %v705 = vsinq.f32.pop %v702
        %vm706 = vweird.f32 %v199
        %v707 = vadd.s32 %v703, 3
        %v708 = vand.u32 %v707, 3
        %vm709 = vcmp.lt.s32.totalorder %v708, 2
        %vm710 = vcmp.eq.s32.totalorder %v708, 0
        %v711 = vxor.u32 %v705, 2147483648
        %v712 = vsel %vm710, %v704, %v711
        %vm713 = vcmp.eq.s32.totalorder %v708, 2
        %v714 = vxor.u32 %v704, 2147483648
        %v715 = vsel %vm713, %v714, %v705
        %v716 = vsel %vm709, %v712, %v715
        %v717 = vsel %vm706, nan, %v716
        %v718 = vand.u32 2147483647, %v200
        %vm719 = vcmp.le.f32.partialorder %v718, 0.7853982
        %vm720 = vcmp.lt.s32.totalorder %v200, 0
        %v721 = vand.u32 %v200, 2139095040
        %v722 = vshrl.u32 %v721, 23
        %v723 = vsub.s32 %v722, 127
        %v724 = vand.u32 2147483647, %v200
        %v725 = vand.u32 %v724, 8388607
        %v726 = vor.u32 %v725, 8388608
        %v727 = vsub.s32 0, %v726
        %v728 = vadd.s32 %v723, 1
        %vm729 = vcmp.gt.s32.totalorder %v728, 0
        %v730 = vsel %vm729, %v728, 0
        %v731 = vshrl.u32 %v730, 5
        %v732 = vand.u32 %v730, 31
        %v733 = vsub.s32 32, %v732
        %v734 = vshrl.u32 683565275, %v733
        %v735 = vshll.u32 683565275, %v732
        %v736 = vshrl.u32 2475754826, %v733
        %v737 = vor.u32 %v735, %v736
        %v738 = vshll.u32 2475754826, %v732
        %v739 = vshrl.u32 2131351028, %v733
        %v740 = vor.u32 %v738, %v739
        %v741 = vshll.u32 2131351028, %v732
        %v742 = vshrl.u32 2102212464, %v733
        %v743 = vor.u32 %v741, %v742
        %v744 = vshll.u32 2102212464, %v732
        %v745 = vshrl.u32 920167782, %v733
        %v746 = vor.u32 %v744, %v745
        %v747 = vshll.u32 920167782, %v732
        %v748 = vshrl.u32 1326507024, %v733
        %v749 = vor.u32 %v747, %v748
        %vm750 = vcmp.lt.s32.totalorder %v731, 1
        %vm751 = vcmp.lt.s32.totalorder %v731, 2
        %vm752 = vcmp.lt.s32.totalorder %v731, 3
        %vm753 = vcmp.lt.s32.totalorder %v731, 4
        %v754 = vsel %vm750, %v734, %v737
        %v755 = vsel %vm753, %v743, 2102212464
        %v756 = vsel %vm752, %v740, %v755
        %v757 = vsel %vm751, %v754, %v756
        %v758 = vsel %vm750, %v737, %v740
        %v759 = vsel %vm753, %v746, 920167782
        %v760 = vsel %vm752, %v743, %v759
        %v761 = vsel %vm751, %v758, %v760
        %v762 = vsel %vm750, %v740, %v743
        %v763 = vsel %vm753, %v749, 1326507024
        %v764 = vsel %vm752, %v746, %v763
        %v765 = vsel %vm751, %v762, %v764
        %v766 = vshll.u32 %v726, 8
        %v767 = vmul.u32.u64.compose %v766, %v765
        %v768 = vextract.low.u32 %v767
        %v769 = vextract.high.u32 %v767
        %v770 = vmul.u32.u64.compose %v766, %v761
        %v771 = vextract.low.u32 %v770
        %v772 = vextract.high.u32 %v770
        %v773 = vmul.u32 %v766, %v757
        %v774 = vadd.s32 %v769, %v771
        %vm775 = vc.u32 %v769, %v771
        %v776 = vadd.s32 %v772, 1
        %v777 = vsel %vm775, %v776, %v772
        %v778 = vadd.s32 %v773, %v777
        %v779 = vadd.s32 %v778, 536870912
        %v780 = vshrl.u32 %v779, 30
        %v781 = vshll.u32 %v780, 30
        %v782 = vsub.s32 %v778, %v781
        %vm783 = vcmp.lt.s32.totalorder %v782, 0
        %v784 = vsub.s32 0, %v782
        %v785 = vsel %vm783, %v784, %v782
        %v786 = vclz %v785
        %v787 = vsub.s32 %v786, 2
        %vm788 = vcmp.gt.s32.totalorder 0, %v787
        %v789 = vsel %vm788, 0, %v787
        %v790 = vsub.s32 32, %v789
        %v791 = vshll.u32 %v782, %v789
        %v792 = vshrl.u32 %v774, %v790
        %v793 = vor.u32 %v791, %v792
        %v794 = vsub.s32 4294967266, %v789
        %v795 = vadd.s32 %v794, 127
        %v796 = vshll.u32 %v795, 23
        %v797 = vor.u32 4788187, %v796
        %v798 = vand.u32 2147483647, %v797
        %v800 = vcvt.s32.f32 %v793
        %v801 = vmul.f32 %v800, %v798
        %v802 = vxor.u32 %v801, 2147483648
        %v803 = vsel %vm720, %v802, %v801
        %v804 = vsub.s32 4, %v780
        %v805 = vsel %vm720, %v804, %v780
        %v806 = vsel %vm719, %v200, %v803
        %v807 = vsel %vm719, 0, %v805
        %v808 = vcosq.f32.pop %v806
        %v809 = vsinq.f32.pop %v806
        %vm810 = vweird.f32 %v200
        %v811 = vadd.s32 %v807, 3
        %v812 = vand.u32 %v811, 3
        %vm813 = vcmp.lt.s32.totalorder %v812, 2
        %vm814 = vcmp.eq.s32.totalorder %v812, 0
        %v815 = vxor.u32 %v809, 2147483648
        %v816 = vsel %vm814, %v808, %v815
        %vm817 = vcmp.eq.s32.totalorder %v812, 2
        %v818 = vxor.u32 %v808, 2147483648
        %v819 = vsel %vm817, %v818, %v809
        %v820 = vsel %vm813, %v816, %v819
        %v821 = vsel %vm810, nan, %v820
        %s822 = sld [smem:[#allocation2]]
        %v823 = vstv %s822
        %v824 = vmul.f32 %v303, %v823
        %v825 = vmul.f32 %v406, %v823
        %s826 = sld [smem:[#allocation4]]
        %v827 = vstv %s826
        %v828 = vmul.f32 %v613, %v827
        %v829 = vmul.f32 %v717, %v827
        %v830 = vsub.f32 %v824, %v828
        %v831 = vsub.f32 %v825, %v829
        %s832 = sld [smem:[#allocation2 + $0x1]]
        %v833 = vstv %s832
        %v834 = vmul.f32 %v303, %v833
        %v835 = vmul.f32 %v406, %v833
        %s836 = sld [smem:[#allocation4 + $0x1]]
        %v837 = vstv %s836
        %v838 = vmul.f32 %v613, %v837
        %v839 = vmul.f32 %v717, %v837
        %v840 = vsub.f32 %v834, %v838
        %v841 = vsub.f32 %v835, %v839
        %844 = vrot.lane.b32.xlu0 %v840, 127
        %v845 = vpop.permute.xlu0 %844
        %846 = vrot.lane.b32.xlu0 %v841, 127
        %v847 = vpop.permute.xlu0 %846
        %v850 = vmul.f32 %v830, %v845
        %v851 = vmul.f32 %v831, %v847
        %s852 = sld [smem:[#allocation2 + $0x2]]
        %v853 = vstv %s852
        %v854 = vmul.f32 %v303, %v853
        %v855 = vmul.f32 %v406, %v853
        %v856 = vmul.f32 %v509, %v853
        %s857 = sld [smem:[#allocation4 + $0x2]]
        %v858 = vstv %s857
        %v859 = vmul.f32 %v613, %v858
        %v860 = vmul.f32 %v717, %v858
        %v861 = vmul.f32 %v821, %v858
        %v862 = vsub.f32 %v854, %v859
        %v863 = vsub.f32 %v855, %v860
        %v864 = vsub.f32 %v856, %v861
        %vm868 = vcmask 1046528
        %v869 = vrot.slane %v862, 1
        %v870 = vrot.slane %v863, 1
        %v871 = vsel %vm868, %v869, %v870
        %v872 = vrot.slane %v864, 1
        %v873 = vsel %vm868, %v870, %v872
        %874 = vrot.lane.b32.xlu0 %v871, 1
        %v875 = vpop.permute.xlu0 %874
        %876 = vrot.lane.b32.xlu0 %v873, 1
        %v877 = vpop.permute.xlu0 %876
        %v880 = vmul.f32 %v850, %v875
        %v881 = vmul.f32 %v851, %v877
        %s882 = sld [smem:[#allocation2 + $0x3]]
        %v883 = vstv %s882
        %v884 = vmul.f32 %v303, %v883
        %v885 = vmul.f32 %v406, %v883
        %v886 = vmul.f32 %v509, %v883
        %s887 = sld [smem:[#allocation4 + $0x3]]
        %v888 = vstv %s887
        %v889 = vmul.f32 %v613, %v888
        %v890 = vmul.f32 %v717, %v888
        %v891 = vmul.f32 %v821, %v888
        %v892 = vsub.f32 %v884, %v889
        %v893 = vsub.f32 %v885, %v890
        %v894 = vsub.f32 %v886, %v891
        %v898 = vrot.slane %v892, 1
        %v899 = vrot.slane %v893, 1
        %v900 = vsel %vm868, %v898, %v899
        %v901 = vrot.slane %v894, 1
        %v902 = vsel %vm868, %v899, %v901
        %v905 = vmul.f32 %v880, %v900
        %v906 = vmul.f32 %v881, %v902
        %s907 = sld [smem:[#allocation2 + $0x4]]
        %v908 = vstv %s907
        %v909 = vmul.f32 %v303, %v908
        %v910 = vmul.f32 %v406, %v908
        %v911 = vmul.f32 %v509, %v908
        %s912 = sld [smem:[#allocation4 + $0x4]]
        %v913 = vstv %s912
        %v914 = vmul.f32 %v613, %v913
        %v915 = vmul.f32 %v717, %v913
        %v916 = vmul.f32 %v821, %v913
        %v917 = vsub.f32 %v909, %v914
        %v918 = vsub.f32 %v910, %v915
        %v919 = vsub.f32 %v911, %v916
        %v923 = vrot.slane %v917, 1
        %v924 = vrot.slane %v918, 1
        %v925 = vsel %vm868, %v923, %v924
        %v926 = vrot.slane %v919, 1
        %v927 = vsel %vm868, %v924, %v926
        %928 = vrot.lane.b32.xlu0 %v925, 127
        %v929 = vpop.permute.xlu0 %928
        %930 = vrot.lane.b32.xlu0 %v927, 127
        %v931 = vpop.permute.xlu0 %930
        %v934 = vmul.f32 %v905, %v929
        %v935 = vmul.f32 %v906, %v931
        %s936 = sld [smem:[#allocation2 + $0x5]]
        %v937 = vstv %s936
        %v938 = vmul.f32 %v303, %v937
        %v939 = vmul.f32 %v406, %v937
        %v940 = vmul.f32 %v509, %v937
        %s941 = sld [smem:[#allocation4 + $0x5]]
        %v942 = vstv %s941
        %v943 = vmul.f32 %v613, %v942
        %v944 = vmul.f32 %v717, %v942
        %v945 = vmul.f32 %v821, %v942
        %v946 = vsub.f32 %v938, %v943
        %v947 = vsub.f32 %v939, %v944
        %v948 = vsub.f32 %v940, %v945
        %vm952 = vcmask 1045504
        %v953 = vrot.slane %v946, 2
        %v954 = vrot.slane %v947, 2
        %v955 = vsel %vm952, %v953, %v954
        %v956 = vrot.slane %v948, 2
        %v957 = vsel %vm952, %v954, %v956
        %958 = vrot.lane.b32.xlu0 %v955, 1
        %v959 = vpop.permute.xlu0 %958
        %960 = vrot.lane.b32.xlu0 %v957, 1
        %v961 = vpop.permute.xlu0 %960
        %v964 = vmul.f32 %v934, %v959
        %v965 = vmul.f32 %v935, %v961
        %s966 = sld [smem:[#allocation2 + $0x6]]
        %v967 = vstv %s966
        %v968 = vmul.f32 %v303, %v967
        %v969 = vmul.f32 %v406, %v967
        %v970 = vmul.f32 %v509, %v967
        %s971 = sld [smem:[#allocation4 + $0x6]]
        %v972 = vstv %s971
        %v973 = vmul.f32 %v613, %v972
        %v974 = vmul.f32 %v717, %v972
        %v975 = vmul.f32 %v821, %v972
        %v976 = vsub.f32 %v968, %v973
        %v977 = vsub.f32 %v969, %v974
        %v978 = vsub.f32 %v970, %v975
        %v982 = vrot.slane %v976, 2
        %v983 = vrot.slane %v977, 2
        %v984 = vsel %vm952, %v982, %v983
        %v985 = vrot.slane %v978, 2
        %v986 = vsel %vm952, %v983, %v985
        %v989 = vmul.f32 %v964, %v984
        %v990 = vmul.f32 %v965, %v986
        %s991 = sld [smem:[#allocation2 + $0x7]]
        %v992 = vstv %s991
        %v993 = vmul.f32 %v303, %v992
        %v994 = vmul.f32 %v406, %v992
        %v995 = vmul.f32 %v509, %v992
        %s996 = sld [smem:[#allocation4 + $0x7]]
        %v997 = vstv %s996
        %v998 = vmul.f32 %v613, %v997
        %v999 = vmul.f32 %v717, %v997
        %v1000 = vmul.f32 %v821, %v997
        %v1001 = vsub.f32 %v993, %v998
        %v1002 = vsub.f32 %v994, %v999
        %v1003 = vsub.f32 %v995, %v1000
        %v1007 = vrot.slane %v1001, 2
        %v1008 = vrot.slane %v1002, 2
        %v1009 = vsel %vm952, %v1007, %v1008
        %v1010 = vrot.slane %v1003, 2
        %v1011 = vsel %vm952, %v1008, %v1010
        %1012 = vrot.lane.b32.xlu0 %v1009, 127
        %v1013 = vpop.permute.xlu0 %1012
        %1014 = vrot.lane.b32.xlu0 %v1011, 127
        %v1015 = vpop.permute.xlu0 %1014
        %v1018 = vmul.f32 %v989, %v1013
        %v1019 = vmul.f32 %v990, %v1015
        %1022 = vrot.lane.b32.xlu0 %v1018, 127
        %v1023 = vpop.permute.xlu0 %1022
        %1024 = vrot.lane.b32.xlu0 %v1019, 127
        %v1025 = vpop.permute.xlu0 %1024
        %vm1028 = vcmask 130048
        %1029 = vst.msk [vmem:[%s197] sm:$0xff] %vm1028, %v1023
        %1030 = vst.msk [vmem:[%s197 + $0x8] sm:$0xff] %vm1028, %v1025
        %p1031 = scmp.lt.s32.totalorder %s16, 1
        %s1032 = scalar_select %p1031, %s16, 1
        %s1033 = smul.addr %s1032, 2
        %s1034 = smul.addr %s1033, 8
        %s1035 = scalar_lea.vmem %s3, %s1034
        // Predicated region
        $region41: #{qconv2d_3x3_forward.1} parent=31 // pred_check
          %p1036 = pneg %p102
        $region42: #{qconv2d_3x3_forward.1} parent=31 // pred_check_branch
          %1038 = sbr.rel (%p1036) target = $region44
        $region43: #{qconv2d_3x3_forward.1} parent=31 // pred_region
          _
        $region44: #{qconv2d_3x3_forward.1} parent=31 // pred_fallthru
          _
      $region32: #{qconv2d_3x3_forward.1} parent=5 // pred_fallthru
        _
      %p1039 = scmp.le.s32.totalorder 2, %s11
      // Predicated region
      $region45: #{qconv2d_3x3_forward.1} parent=5 // pred_check
        %p1040 = pneg %p1039
      $region46: #{qconv2d_3x3_forward.1} parent=5 // pred_check_branch
        %1042 = sbr.rel (%p1040) target = $region48
      $region47: #{qconv2d_3x3_forward.1} parent=5 // pred_region
        %s1043 = ssub.s32 %s11, 2
        // Predicated region
        $region49: #{qconv2d_3x3_forward.1} parent=47 // pred_check
          %p1044 = pneg %p108
        $region50: #{qconv2d_3x3_forward.1} parent=47 // pred_check_branch
          %1046 = sbr.rel (%p1044) target = $region52
        $region51: #{qconv2d_3x3_forward.1} parent=47 // pred_region
          %p1047 = scmp.lt.s32.totalorder %s17, 1
          %s1048 = scalar_select %p1047, %s17, 1
          %s1049 = smul.addr %s1048, 2
          %s1050 = smul.addr %s1049, 8
          %s1051 = scalar_lea.vmem %s3, %s1050
        $region52: #{qconv2d_3x3_forward.1} parent=47 // pred_fallthru
          _
      $region48: #{qconv2d_3x3_forward.1} parent=5 // pred_fallthru
        _
    $region6: #{qconv2d_3x3_forward.1} parent=1 // loop_footer
      %s15 = sadd.s32 1, %s11
    $region7: #{qconv2d_3x3_forward.1} parent=1 // loop_footer_branch
      %10 = sbr.rel target = $region3
    $region8: #{qconv2d_3x3_forward.1} parent=1 // loop_exit
      _
    %1052 = vsyncpa [#allocation3], 1
    %s1053 = scalar_lea.sflag [#allocation3], 1
    %1054 = vsyncpa %s1053, 1
    %1055 = vsyncpa [#allocation5], 1

</llo_original>
